<compile_context>
chip_gen: v6e
topology: v6e:2x2x1
jax: 0.10.0
libtpu: 0.0.40
codegen_flags: <defaults>
</compile_context>

<pallas_src>
import jax
import jax.numpy as jnp
from jax.experimental import pallas as pl
from jax.experimental.pallas import tpu as pltpu


def _disc_score_kernel(h_pl_ref, h_mi_ref, wc_ref, bias_ref, out_ref):
    # Blocks per grid step (batch tile TB, node tile TN):
    #   h_pl_ref : (TB, TN, H)  native dtype (streamed, dominates HBM traffic)
    #   h_mi_ref : (TB, TN, H)
    #   wc_ref   : (TB, 1,  H)  f32 precomputed W @ c[b]  (or c[b] for inner product)
    #   bias_ref : (1,) in SMEM scalar bilinear bias
    #   out_ref  : (TB, 2, TN)  f32 [pos | neg] score tile, lane-dense on TN
    bias = bias_ref[0]
    wc = wc_ref[...]                                     # (TB, 1, H) f32
    hp = h_pl_ref[...].astype(jnp.float32)               # (TB, TN, H)
    hm = h_mi_ref[...].astype(jnp.float32)

    out_ref[:, 0, :] = jnp.sum(hp * wc, axis=-1) + bias  # (TB, TN) f32 accum
    out_ref[:, 1, :] = jnp.sum(hm * wc, axis=-1) + bias


def _choose_tiles(B, N, H, h_itemsize, vmem_budget=8 << 20):
    """Pick (TB, TN).  Per-step VMEM ~= 2 inputs x 2 pipeline buffers x TB*TN*H*itemsize."""

    def step_bytes(tb, tn):
        return 4 * tb * tn * H * h_itemsize

    # Node tile: full N when it fits, otherwise a multiple of 128 (lane-dense
    # output last dim, sublane-aligned h-block second-to-last dim).
    if step_bytes(1, N) <= vmem_budget:
        TN = N
    else:
        TN = 128
        for cand in (2048, 1024, 512, 256, 128):
            if cand <= N and step_bytes(1, cand) <= vmem_budget:
                TN = cand
                break

    # Batch tile: largest divisor of B that still fits (TB only ever appears as
    # a leading/third-from-last block dim, so any divisor is layout-legal).
    TB = 1
    for cand in (32, 16, 8, 4, 2):
        if cand <= B and B % cand == 0 and step_bytes(cand, TN) <= vmem_budget:
            TB = cand
            break
    return TB, TN


def discriminator_forward(c, h_pl, h_mi, weight=None, bias=None,
                          s_bias1=None, s_bias2=None, critic="bilinear"):
    """Pallas implementation of Discriminator.forward.

    c: (B, H), h_pl/h_mi: (B, N, H) (any float dtype; bf16 recommended for the
    node embeddings), weight: (1, H, H), bias: (1,).  Returns (B, 2*N) float32.
    """
    B, N, H = h_pl.shape

    if critic == "bilinear":
        # Hoisted: one dense, fully-utilized XLA matmul instead of B in-kernel
        # (H,H)x(H,1) matvecs; W never enters the kernel / VMEM.
        W = weight.reshape(H, H).astype(jnp.float32)
        wc = jnp.dot(c.astype(jnp.float32), W.T)            # (B, H) f32
        bias1 = bias.reshape(1).astype(jnp.float32)
    elif critic == "inner product":
        wc = c.astype(jnp.float32)                          # (B, H) f32
        bias1 = jnp.zeros((1,), jnp.float32)
    else:
        raise ValueError(f"unsupported critic: {critic!r}")
    wc = wc[:, None, :]                                     # (B, 1, H)

    TB, TN = _choose_tiles(B, N, H, jnp.dtype(h_pl.dtype).itemsize)
    grid = (B // TB, pl.cdiv(N, TN))

    out = pl.pallas_call(
        _disc_score_kernel,
        out_shape=jax.ShapeDtypeStruct((B, 2, N), jnp.float32),
        grid_spec=pltpu.PrefetchScalarGridSpec(
            num_scalar_prefetch=0,
            grid=grid,
            in_specs=[
                pl.BlockSpec((TB, TN, H), lambda b, n: (b, n, 0)),   # h_pl (native dtype)
                pl.BlockSpec((TB, TN, H), lambda b, n: (b, n, 0)),   # h_mi (native dtype)
                pl.BlockSpec((TB, 1, H), lambda b, n: (b, 0, 0)),    # wc (f32)
                pl.BlockSpec(memory_space=pltpu.MemorySpace.SMEM),   # bias scalar
            ],
            out_specs=pl.BlockSpec((TB, 2, TN), lambda b, n: (b, 0, n)),
        ),
        compiler_params=pltpu.CompilerParams(
            dimension_semantics=("parallel", "parallel")),
    )(h_pl, h_mi, wc, bias1)

    # (B, 2, N) -> (B, 2*N): contiguous-dim merge, no data movement.
    logits = out.reshape(B, 2 * N)

    # Optional additive score biases (tiny plain-JAX glue, same semantics as torch).
    if s_bias1 is not None:
        logits = logits.at[:, :N].add(s_bias1)
    if s_bias2 is not None:
        logits = logits.at[:, N:].add(s_bias2)
    return logits


def _reference_bilinear(c, h_pl, h_mi, weight, bias):
    # Pure-JAX reference of nn.Bilinear(n_h, n_h, 1) applied to (h, expand(c)).
    W = weight.reshape(weight.shape[1], weight.shape[2])
    wc = jnp.einsum("ij,bj->bi", W, c)                       # (B, H)
    sc1 = jnp.einsum("bni,bi->bn", h_pl, wc) + bias[0]
    sc2 = jnp.einsum("bni,bi->bn", h_mi, wc) + bias[0]
    return jnp.concatenate([sc1, sc2], axis=1)


if __name__ == "__main__":
    # --- small shape consistent with the module: batch=2, nodes=8, hidden=32 ---
    B, N, H = 2, 8, 32

    key = jax.random.PRNGKey(0)
    k_c, k_pl, k_mi, k_w = jax.random.split(key, 4)

    c = jax.random.normal(k_c, (B, H), dtype=jnp.float32)
    h_pl = jax.random.normal(k_pl, (B, N, H), dtype=jnp.float32)
    h_mi = jax.random.normal(k_mi, (B, N, H), dtype=jnp.float32)

    # nn.Bilinear(n_h, n_h, 1): weight (1, H, H) xavier_uniform, bias (1,) zeros.
    bound = (6.0 / (H * H + H)) ** 0.5
    weight = jax.random.uniform(k_w, (1, H, H), minval=-bound, maxval=bound,
                                dtype=jnp.float32)
    bias = jnp.zeros((1,), dtype=jnp.float32)

    ref = _reference_bilinear(c, h_pl, h_mi, weight, bias)

    # f32 path.
    logits = discriminator_forward(c, h_pl, h_mi, weight, bias)
    jax.block_until_ready(logits)
    assert logits.shape == (B, 2 * N)
    assert jnp.allclose(logits, ref, atol=1e-4, rtol=1e-4)

    # bf16 streaming path (halves HBM traffic on the dominant h_pl/h_mi reads;
    # accumulation stays f32 in-kernel) -- loose tolerance vs f32 reference.
    logits_bf16 = discriminator_forward(
        c, h_pl.astype(jnp.bfloat16), h_mi.astype(jnp.bfloat16), weight, bias)
    jax.block_until_ready(logits_bf16)
    assert jnp.allclose(logits_bf16, ref, atol=2e-1, rtol=2e-1)

    # Optional s_bias1 / s_bias2 path.
    sb1 = jax.random.normal(jax.random.PRNGKey(1), (B, N), dtype=jnp.float32)
    sb2 = jax.random.normal(jax.random.PRNGKey(2), (B, N), dtype=jnp.float32)
    logits_sb = discriminator_forward(c, h_pl, h_mi, weight, bias,
                                      s_bias1=sb1, s_bias2=sb2)
    ref_sb = ref.at[:, :N].add(sb1).at[:, N:].add(sb2)
    assert jnp.allclose(logits_sb, ref_sb, atol=1e-4, rtol=1e-4)

    # 'inner product' critic branch (same kernel, wc = c, no bias).
    logits_ip = discriminator_forward(c, h_pl, h_mi, critic="inner product")
    ref_ip = jnp.concatenate([jnp.einsum("bni,bi->bn", h_pl, c),
                              jnp.einsum("bni,bi->bn", h_mi, c)], axis=1)
    assert jnp.allclose(logits_ip, ref_ip, atol=1e-4, rtol=1e-4)

    # DGI-like larger graph to exercise the N-tiled grid (B=1, N=4096, H=256
    # => TN=1024, 4 node tiles, per-step double-buffered VMEM ~8 MiB).
    B2, N2, H2 = 1, 4096, 256
    k2 = jax.random.split(jax.random.PRNGKey(3), 4)
    c2 = jax.random.normal(k2[0], (B2, H2), dtype=jnp.float32)
    hp2 = jax.random.normal(k2[1], (B2, N2, H2), dtype=jnp.float32)
    hm2 = jax.random.normal(k2[2], (B2, N2, H2), dtype=jnp.float32)
    bound2 = (6.0 / (H2 * H2 + H2)) ** 0.5
    w2 = jax.random.uniform(k2[3], (1, H2, H2), minval=-bound2, maxval=bound2,
                            dtype=jnp.float32)
    b2 = jnp.zeros((1,), dtype=jnp.float32)
    out2 = discriminator_forward(c2, hp2, hm2, w2, b2)
    jax.block_until_ready(out2)
    ref2 = _reference_bilinear(c2, hp2, hm2, w2, b2)
    assert out2.shape == (B2, 2 * N2)
    assert jnp.allclose(out2, ref2, atol=3e-3, rtol=3e-3)

    print("KERNEL_OK")
</pallas_src>

<mosaic_0001>
module attributes {stable_mosaic.version = 11 : i64} {
  func.func @_disc_score_kernel(%arg0: i32, %arg1: i32, %arg2: memref<2x8x32xf32, #tpu.memory_space<vmem>>, %arg3: memref<2x8x32xf32, #tpu.memory_space<vmem>>, %arg4: memref<2x1x32xf32, #tpu.memory_space<vmem>>, %arg5: memref<1xf32, #tpu.memory_space<smem>>, %arg6: memref<2x2x8xf32, #tpu.memory_space<vmem>>) attributes {dimension_semantics = [#tpu.dimension_semantics<parallel>, #tpu.dimension_semantics<parallel>], iteration_bounds = array<i64: 1, 1>, scalar_prefetch = 0 : i64, scratch_operands = 0 : i64, tpu.core_type = #tpu.core_type<tc>, window_params = [{transform_indices = @transform_0, window_bounds = array<i64: 2, 8, 32>}, {transform_indices = @transform_1, window_bounds = array<i64: 2, 8, 32>}, {transform_indices = @transform_2, window_bounds = array<i64: 2, 1, 32>}, {transform_indices = @transform_3, window_bounds = array<i64: 1>}, {transform_indices = @transform_4, window_bounds = array<i64: 2, 2, 8>}]} {
    %c0 = arith.constant 0 : index
    %0 = memref.load %arg5[%c0] : memref<1xf32, #tpu.memory_space<smem>>
    %c0_0 = arith.constant 0 : index
    %c0_1 = arith.constant 0 : index
    %c0_2 = arith.constant 0 : index
    %1 = vector.load %arg4[%c0_0, %c0_1, %c0_2] : memref<2x1x32xf32, #tpu.memory_space<vmem>>, vector<2x1x32xf32>
    %c0_3 = arith.constant 0 : index
    %c0_4 = arith.constant 0 : index
    %c0_5 = arith.constant 0 : index
    %2 = vector.load %arg2[%c0_3, %c0_4, %c0_5] : memref<2x8x32xf32, #tpu.memory_space<vmem>>, vector<2x8x32xf32>
    %c0_6 = arith.constant 0 : index
    %c0_7 = arith.constant 0 : index
    %c0_8 = arith.constant 0 : index
    %3 = vector.load %arg3[%c0_6, %c0_7, %c0_8] : memref<2x8x32xf32, #tpu.memory_space<vmem>>, vector<2x8x32xf32>
    %4 = vector.broadcast %1 : vector<2x1x32xf32> to vector<2x8x32xf32>
    %5 = arith.mulf %2, %4 : vector<2x8x32xf32>
    %cst = arith.constant dense<0.000000e+00> : vector<2x8xf32>
    %6 = vector.multi_reduction <add>, %5, %cst [2] : vector<2x8x32xf32> to vector<2x8xf32>
    %7 = vector.broadcast %0 : f32 to vector<2x8xf32>
    %8 = arith.addf %6, %7 : vector<2x8xf32>
    %c0_9 = arith.constant 0 : index
    %c0_10 = arith.constant 0 : index
    %c0_11 = arith.constant 0 : index
    %9 = vector.load %arg6[%c0_9, %c0_10, %c0_11] : memref<2x2x8xf32, #tpu.memory_space<vmem>>, vector<2x1x8xf32>
    %10 = vector.shape_cast %9 : vector<2x1x8xf32> to vector<2x8xf32>
    %11 = vector.shape_cast %8 : vector<2x8xf32> to vector<2x1x8xf32>
    tpu.vector_store %arg6[%c0_9, %c0_10, %c0_11], %11 {strides = array<i32>} : memref<2x2x8xf32, #tpu.memory_space<vmem>>, vector<2x1x8xf32>,
    %12 = vector.broadcast %1 : vector<2x1x32xf32> to vector<2x8x32xf32>
    %13 = arith.mulf %3, %12 : vector<2x8x32xf32>
    %cst_12 = arith.constant dense<0.000000e+00> : vector<2x8xf32>
    %14 = vector.multi_reduction <add>, %13, %cst_12 [2] : vector<2x8x32xf32> to vector<2x8xf32>
    %15 = vector.broadcast %0 : f32 to vector<2x8xf32>
    %16 = arith.addf %14, %15 : vector<2x8xf32>
    %c0_13 = arith.constant 0 : index
    %c1 = arith.constant 1 : index
    %c0_14 = arith.constant 0 : index
    %17 = vector.load %arg6[%c0_13, %c1, %c0_14] : memref<2x2x8xf32, #tpu.memory_space<vmem>>, vector<2x1x8xf32>
    %18 = vector.shape_cast %17 : vector<2x1x8xf32> to vector<2x8xf32>
    %19 = vector.shape_cast %16 : vector<2x8xf32> to vector<2x1x8xf32>
    tpu.vector_store %arg6[%c0_13, %c1, %c0_14], %19 {strides = array<i32>} : memref<2x2x8xf32, #tpu.memory_space<vmem>>, vector<2x1x8xf32>,
    return
  }
  func.func @transform_0(%arg0: i32, %arg1: i32) -> (i32, i32, i32) {
    %c0_i32 = arith.constant 0 : i32
    %c0_i32_0 = arith.constant 0 : i32
    return %arg0, %arg1, %c0_i32 : i32, i32, i32
  }
  func.func @transform_1(%arg0: i32, %arg1: i32) -> (i32, i32, i32) {
    %c0_i32 = arith.constant 0 : i32
    %c0_i32_0 = arith.constant 0 : i32
    return %arg0, %arg1, %c0_i32 : i32, i32, i32
  }
  func.func @transform_2(%arg0: i32, %arg1: i32) -> (i32, i32, i32) {
    %c0_i32 = arith.constant 0 : i32
    %c0_i32_0 = arith.constant 0 : i32
    %c0_i32_1 = arith.constant 0 : i32
    return %arg0, %c0_i32, %c0_i32_0 : i32, i32, i32
  }
  func.func @transform_3(%arg0: i32, %arg1: i32) -> i32 {
    %c0_i32 = arith.constant 0 : i32
    %c0_i32_0 = arith.constant 0 : i32
    return %c0_i32 : i32
  }
  func.func @transform_4(%arg0: i32, %arg1: i32) -> (i32, i32, i32) {
    %c0_i32 = arith.constant 0 : i32
    %c0_i32_0 = arith.constant 0 : i32
    return %arg0, %c0_i32, %arg1 : i32, i32, i32
  }
}

</mosaic_0001>

<llo_original>
// kernel: tpu_custom_call.1
$region0: #{tpu_custom_call.1}
  #allocation0 [shape = 'u32[]', space=smem, size = 0x4, offset = 0x4, fixed_abs, tag = 'smem constant byte address 0x4 - core index']
  #allocation1 [shape = 'u32[144,128]{1,0:T(1,128)}', space=vmem, size = 0x12000, scoped, tag = 'internal scratch']
  #allocation2 [shape = 'f32[1]{0:T(128)S(6)}', space=smem, size = 0x200, scoped, tag = 'scoped memory for tpu_custom_call.1']
  %s0 = inlined_call_operand.hbm [shape: f32[2,8,32], index: 0, kind: input, shape index: {}]
  %s1 = inlined_call_operand.hbm [shape: f32[2,8,32], index: 1, kind: input, shape index: {}]
  %s2 = inlined_call_operand.vmem [shape: f32[2,1,32], index: 2, kind: input, shape index: {}]
  %s3 = inlined_call_operand.<no memory space> [shape: f32[1], index: 3, kind: input, shape index: {}]
  %s4 = inlined_call_operand.hbm [shape: f32[2,2,8], index: 4, kind: output, shape index: {}]
  %s5 = sld [smem:[#allocation0]]
  $region34: #{tpu_custom_call.1} parent=0
    _
  %s7 = ssub.s32 1, %s5
  %s8 = scalar_select 0, %s7, %s5
  %9 = sst [smem:[#allocation2]] %s3
  $region1: #{tpu_custom_call.1} parent=0
    #allocation3 [shape = 'u8[8192]{0}', space=vmem, size = 0x2000, scoped, tag = 'input window, operand 0, single buffered']
    #allocation4 [shape = 's32[1]{0}', space=sflag, size = 0x4, scoped, tag = 'scoped memory for tpu_custom_call.1']
    #allocation5 [shape = 's32[1]{0}', space=sflag, size = 0x4, scoped, tag = 'scoped memory for tpu_custom_call.1']
    #allocation6 [shape = 'u8[8192]{0}', space=vmem, size = 0x2000, scoped, tag = 'input window, operand 1, single buffered']
    #allocation7 [shape = 's32[1]{0}', space=sflag, size = 0x4, scoped, tag = 'scoped memory for tpu_custom_call.1']
    #allocation8 [shape = 'u8[2048]{0}', space=vmem, size = 0x800, scoped, tag = 'output window, operand 0, single buffered']
    %10 = vsyncpa [#allocation4], 0
    %11 = vsyncpa [#allocation7], 0
    %12 = vsyncpa [#allocation5], 0
    // Predicated region
    $region2: #{tpu_custom_call.1} parent=1 // pred_check
      _
    $region3: #{tpu_custom_call.1} parent=1 // pred_check_branch
      %14 = sbr.rel (0) target = $region5
    $region4: #{tpu_custom_call.1} parent=1 // pred_region
      %s16 = ssub.s32 256, 256
      %17 = vsyncadd [#allocation4], %s16
      %s18 = sshll.u32 [#allocation3], 4
      %s19 = int_to_ptr.vmem [resolvable:$true] %s18
      %24 = dma.hbm_to_vmem [thread:$0]  %s0, 256, %s19, [#allocation4], 128, 128, 8
    $region5: #{tpu_custom_call.1} parent=1 // pred_fallthru
      _
    // Predicated region
    $region6: #{tpu_custom_call.1} parent=1 // pred_check
      _
    $region7: #{tpu_custom_call.1} parent=1 // pred_check_branch
      %26 = sbr.rel (0) target = $region9
    $region8: #{tpu_custom_call.1} parent=1 // pred_region
      %s28 = ssub.s32 256, 256
      %29 = vsyncadd [#allocation7], %s28
      %s30 = sshll.u32 [#allocation6], 4
      %s31 = int_to_ptr.vmem [resolvable:$true] %s30
      %36 = dma.hbm_to_vmem [thread:$0]  %s1, 256, %s31, [#allocation7], 128, 128, 8
    $region9: #{tpu_custom_call.1} parent=1 // pred_fallthru
      _
    // Predicated region
    $region10: #{tpu_custom_call.1} parent=1 // pred_check
      _
    $region11: #{tpu_custom_call.1} parent=1 // pred_check_branch
      %38 = sbr.rel (0) target = $region13
    $region12: #{tpu_custom_call.1} parent=1 // pred_region
      _
    $region13: #{tpu_custom_call.1} parent=1 // pred_fallthru
      _
    // Predicated region
    $region14: #{tpu_custom_call.1} parent=1 // pred_check
      _
    $region15: #{tpu_custom_call.1} parent=1 // pred_check_branch
      %40 = sbr.rel (0) target = $region17
    $region16: #{tpu_custom_call.1} parent=1 // pred_region
      _
    $region17: #{tpu_custom_call.1} parent=1 // pred_fallthru
      _
    // Predicated region
    $region18: #{tpu_custom_call.1} parent=1 // pred_check
      _
    $region19: #{tpu_custom_call.1} parent=1 // pred_check_branch
      %42 = sbr.rel (0) target = $region21
    $region20: #{tpu_custom_call.1} parent=1 // pred_region
      %43 = dma.done [#allocation4], 256
    $region21: #{tpu_custom_call.1} parent=1 // pred_fallthru
      _
    // Predicated region
    $region22: #{tpu_custom_call.1} parent=1 // pred_check
      _
    $region23: #{tpu_custom_call.1} parent=1 // pred_check_branch
      %45 = sbr.rel (0) target = $region25
    $region24: #{tpu_custom_call.1} parent=1 // pred_region
      %46 = dma.done [#allocation7], 256
    $region25: #{tpu_custom_call.1} parent=1 // pred_fallthru
      _
    %s47 = sld [smem:[#allocation2]]
    %v48 = vld [vmem:[%s2] sm:$0x1]
    %v49 = vld [vmem:[%s2 + $0x1] sm:$0x1]
    %v50 = vld [vmem:[#allocation3] sm:$0xff]
    %v51 = vld [vmem:[#allocation3 + $0x8] sm:$0xff]
    %v52 = vld [vmem:[#allocation6] sm:$0xff]
    %v53 = vld [vmem:[#allocation6 + $0x8] sm:$0xff]
    %v56 = vlaneseq
    %v57 = vshrl.u32 %v56, 7
    %v58 = vsub.s32 0, %v57
    %v59 = vrot.slane %v48, %v58
    %v60 = vlaneseq
    %v61 = vshrl.u32 %v60, 7
    %v62 = vsub.s32 0, %v61
    %v63 = vrot.slane %v49, %v62
    %v66 = vmul.f32 %v50, %v59
    %v67 = vmul.f32 %v51, %v63
    %vm68 = vcmask 261120
    %v69 = vsel %vm68, %v66, 0.0
    %70 = vadd.xlane.f32.xlu0 %v69
    %v71 = vpop.xlane.xlu0 %70
    %v72 = vsel %vm68, %v67, 0.0
    %73 = vadd.xlane.f32.xlu0 %v72
    %v74 = vpop.xlane.xlu0 %73
    %v75 = vstv %s47
    %v76 = vadd.f32 %v71, %v75
    %v77 = vadd.f32 %v74, %v75
    %v80 = vlaneseq
    %v81 = vand.u32 %v80, 127
    %v82 = vlaneseq
    %v83 = vshrl.u32 %v82, 7
    %v84 = vsub.s32 %v81, %v83
    %v85 = vrot.slane %v76, %v84
    %v86 = vlaneseq
    %v87 = vshrl.u32 %v86, 7
    %v88 = vsub.s32 %v81, %v87
    %v89 = vrot.slane %v77, %v88
    %vm92 = vcmask 57344
    %93 = vst.msk [vmem:[#allocation8] sm:$0x1] %vm92, %v85
    %94 = vst.msk [vmem:[#allocation8 + $0x2] sm:$0x1] %vm92, %v89
    %v95 = vmul.f32 %v52, %v59
    %v96 = vmul.f32 %v53, %v63
    %v97 = vsel %vm68, %v95, 0.0
    %98 = vadd.xlane.f32.xlu0 %v97
    %v99 = vpop.xlane.xlu0 %98
    %v100 = vsel %vm68, %v96, 0.0
    %101 = vadd.xlane.f32.xlu0 %v100
    %v102 = vpop.xlane.xlu0 %101
    %v103 = vadd.f32 %v99, %v75
    %v104 = vadd.f32 %v102, %v75
    %v107 = vlaneseq
    %v108 = vshrl.u32 %v107, 7
    %v109 = vsub.s32 %v81, %v108
    %v110 = vrot.slane %v103, %v109
    %v111 = vlaneseq
    %v112 = vshrl.u32 %v111, 7
    %v113 = vsub.s32 %v81, %v112
    %v114 = vrot.slane %v104, %v113
    %117 = vst.msk [vmem:[#allocation8 + $0x1] sm:$0x1] %vm92, %v110
    %118 = vst.msk [vmem:[#allocation8 + $0x3] sm:$0x1] %vm92, %v114
    // Predicated region
    $region26: #{tpu_custom_call.1} parent=1 // pred_check
      _
    $region27: #{tpu_custom_call.1} parent=1 // pred_check_branch
      %120 = sbr.rel (0) target = $region29
    $region28: #{tpu_custom_call.1} parent=1 // pred_region
      %s122 = ssub.s32 64, 64
      %123 = vsyncadd [#allocation5], %s122
      %s124 = sshll.u32 [#allocation8], 4
      %s125 = int_to_ptr.vmem [resolvable:$true] %s124
      %130 = dma.vmem_to_hbm [thread:$0]  %s125, 64, %s4, [#allocation5], 32, 32, 2
    $region29: #{tpu_custom_call.1} parent=1 // pred_fallthru
      _
    // Predicated region
    $region30: #{tpu_custom_call.1} parent=1 // pred_check
      _
    $region31: #{tpu_custom_call.1} parent=1 // pred_check_branch
      %132 = sbr.rel (0) target = $region33
    $region32: #{tpu_custom_call.1} parent=1 // pred_region
      %133 = dma.done [#allocation5], 64
    $region33: #{tpu_custom_call.1} parent=1 // pred_fallthru
      _
    %134 = vsyncpa [#allocation4], 1
    %135 = vsyncpa [#allocation7], 1
    %136 = vsyncpa [#allocation5], 1

</llo_original>
